<compile_context>
chip_gen: v6e
topology: v6e:2x2x1
jax: 0.10.0
libtpu: 0.0.40
codegen_flags: <defaults>
</compile_context>

<pallas_src>
import functools

import jax
import jax.numpy as jnp
import numpy as np
from jax.experimental import pallas as pl
from jax.experimental.pallas import tpu as pltpu


_VMEM_LIMIT = 32 * 1024 * 1024  # explicit cap, safe on v5e / v6e / v7x


# ---------------------------------------------------------------------------
# One-time parameter preparation (hoisted out of the per-step path).
# ---------------------------------------------------------------------------
def prepare_params(mu, lam, m, rho, omega, l, *, N, M):
    f32 = jnp.float32
    mu = mu.astype(f32)
    l = l.astype(f32)
    lam_s = jnp.asarray(lam, f32).reshape(())
    D = N + M

    # Column-layout (batch-in-lanes) "mixing" matrix, acts from the left on
    # Y^T = [C^T ; R^T]:  P[:N] = (1-lam)*mu @ R^T,  P[N:] = mu^T @ C^T.
    Wt = jnp.zeros((D, D), f32)
    Wt = Wt.at[:N, N:].set((1.0 - lam_s) * mu)
    Wt = Wt.at[N:, :N].set(mu.T)

    # "Collect" matrix: top block I passes r_mut*C through; bottom block
    # (lam*l - I) folds both lam*(S @ l.T) and the standalone "-S" term.
    G2 = jnp.zeros((D, D), f32)
    G2 = G2.at[:N, :N].set(jnp.eye(N, dtype=f32))
    G2 = G2.at[N:, N:].set(lam_s * l - jnp.eye(M, dtype=f32))

    dvec = jnp.concatenate([m.astype(f32), omega.astype(f32)]).reshape(D, 1)
    rvec = jnp.concatenate([jnp.zeros((N,), f32), rho.astype(f32)]).reshape(D, 1)

    return dict(
        # Column layout (batch-in-lanes): fused Euler rollout kernel.
        Wt=Wt, G2=G2, dvec_col=dvec, rvec_col=rvec,
        # Row layout (batch-in-sublanes): single-RHS forward kernel.
        W_row=Wt.T, G2_row=G2.T,
        dvec_row=dvec.reshape(1, D), rvec_row=rvec.reshape(1, D),
    )


# ---------------------------------------------------------------------------
# Batch-tile pickers (snap user requests to valid tiles instead of silently
# ignoring them; prefer grid >= 2 so v7x can shard across its 2 TensorCores).
# ---------------------------------------------------------------------------
def _pick_row_tile(B, target=1024):
    """Largest multiple-of-8 divisor of B that is <= target (else B)."""
    best = None
    for cand in range(min(int(target), B), 7, -1):
        if B % cand == 0 and cand % 8 == 0:
            best = cand
            break
    if best is None:
        return B                       # whole batch in one block (tiny B)
    if best == B and B >= 16 and (B // 2) % 8 == 0:
        best = B // 2                  # guarantee grid >= 2 when possible
    return best


def _pick_lane_tile(B, target=2048):
    """Largest multiple-of-128 divisor of B that is <= target (else B)."""
    best = None
    cand = (min(int(target), B) // 128) * 128
    while cand >= 128:
        if B % cand == 0:
            best = cand
            break
        cand -= 128
    if best is None:
        return B
    if best == B and B >= 256 and (B // 2) % 128 == 0:
        best = B // 2
    return best


# ---------------------------------------------------------------------------
# Single RHS evaluation (== ODEFunc.forward on a stacked batch), row layout.
# One combined (tb, N+M) output -> no wrapper concatenate.
# ---------------------------------------------------------------------------
def _odefunc_kernel(ys_ref, w_ref, g2_ref, dvec_ref, rvec_ref, dydt_ref):
    Y = ys_ref[...]                                             # (tb, N+M)
    P = jnp.dot(Y, w_ref[...], preferred_element_type=jnp.float32)
    Q = P * Y                                                   # [r_mut*C | S]
    dY = (jnp.dot(Q, g2_ref[...], preferred_element_type=jnp.float32)
          - Y * dvec_ref[...] + rvec_ref[...])
    dydt_ref[...] = jnp.where(Y > 0.0, dY, 0.0)                 # positivity mask


def ode_func_forward(ys, params, *, N, M, block_rows=None):
    """Batched ODEFunc.forward: ys (B, N+M) -> dydts (B, N+M)."""
    B, D = ys.shape
    assert D == N + M
    tb = _pick_row_tile(B, block_rows if block_rows else 1024)
    grid = (B // tb,)
    const = lambda shape: pl.BlockSpec(shape, lambda i: (0, 0))  # resident param

    return pl.pallas_call(
        _odefunc_kernel,
        grid=grid,
        out_shape=jax.ShapeDtypeStruct((B, D), jnp.float32),
        in_specs=[
            pl.BlockSpec((tb, D), lambda i: (i, 0)),   # ys batch tile
            const((D, D)),                             # W_row  (mix)
            const((D, D)),                             # G2_row (collect)
            const((1, D)),                             # dvec = [m, omega]
            const((1, D)),                             # rvec = [0, rho]
        ],
        out_specs=pl.BlockSpec((tb, D), lambda i: (i, 0)),
        compiler_params=pltpu.CompilerParams(
            dimension_semantics=("parallel",),
            vmem_limit_bytes=_VMEM_LIMIT),
    )(ys.astype(jnp.float32), params["W_row"], params["G2_row"],
      params["dvec_row"], params["rvec_row"])


# ---------------------------------------------------------------------------
# Fused multi-step explicit-Euler rollout, batch-in-lanes (transposed) layout.
# Parameters stay resident in VMEM; only the final state is written back.
# ---------------------------------------------------------------------------
def _odefunc_euler_kernel(yT_ref, wt_ref, g2_ref, dvec_ref, rvec_ref,
                          yT_out_ref, *, num_steps, dt, unroll):
    Wt = wt_ref[...]
    G2 = g2_ref[...]
    D, tl = yT_ref.shape
    # Hoist the (D,1)->(D,tl) broadcasts out of the serial step loop
    # (broadcast_in_dim is not CSE'd; in the body it would be re-emitted
    # every unrolled step).
    dvec = jnp.broadcast_to(dvec_ref[...], (D, tl))
    rvec = jnp.broadcast_to(rvec_ref[...], (D, tl))

    def step(_, Y):
        P = jnp.dot(Wt, Y, preferred_element_type=jnp.float32)   # mix
        Q = P * Y                                                 # [r_mut*C ; S]
        dY = jnp.dot(G2, Q, preferred_element_type=jnp.float32) - dvec * Y + rvec
        return Y + dt * jnp.where(Y > 0.0, dY, 0.0)

    Y = jax.lax.fori_loop(0, num_steps, step, yT_ref[...], unroll=unroll)
    yT_out_ref[...] = Y


def ode_func_integrate_euler(ys, params, *, N, M, num_steps, dt,
                             block_lanes=None, unroll=4, transposed_io=False):
    """Fixed-step Euler rollout: `num_steps` RHS evaluations in ONE kernel.

    State is carried batch-in-lanes (Y^T, shape (N+M, B)) so all per-step
    vector work is lane-dense.  With transposed_io=True the caller passes and
    receives the (N+M, B) layout directly (no wrapper transposes) -- use that
    when chaining rollouts.
    """
    D = N + M
    ysT = ys.astype(jnp.float32) if transposed_io else ys.astype(jnp.float32).T
    B = ysT.shape[1]
    tl = _pick_lane_tile(B, block_lanes if block_lanes else 2048)
    grid = (B // tl,)
    kernel = functools.partial(
        _odefunc_euler_kernel, num_steps=int(num_steps), dt=float(dt),
        unroll=max(1, min(int(unroll), int(num_steps))))
    const = lambda shape: pl.BlockSpec(shape, lambda i: (0, 0))

    yT = pl.pallas_call(
        kernel,
        grid=grid,
        out_shape=jax.ShapeDtypeStruct((D, B), jnp.float32),
        in_specs=[
            pl.BlockSpec((D, tl), lambda i: (0, i)),   # Y^T batch tile (lanes)
            const((D, D)),                             # Wt  (mix)
            const((D, D)),                             # G2  (collect)
            const((D, 1)),                             # dvec = [m; omega]
            const((D, 1)),                             # rvec = [0; rho]
        ],
        out_specs=pl.BlockSpec((D, tl), lambda i: (0, i)),
        input_output_aliases={0: 0},                   # donate the state buffer
        compiler_params=pltpu.CompilerParams(
            dimension_semantics=("parallel",),
            vmem_limit_bytes=_VMEM_LIMIT),
    )(ysT, params["Wt"], params["G2"], params["dvec_col"], params["rvec_col"])
    return yT if transposed_io else yT.T


# ---------------------------------------------------------------------------
# Pure-JAX references (match the PyTorch loop-over-ys semantics).
# ---------------------------------------------------------------------------
def ode_func_reference(ys, mu, lam, m, rho, omega, l, *, N, M):
    hp = jax.lax.Precision.HIGHEST
    C = ys[:, :N]
    R = ys[:, N:]
    lam_s = lam.reshape(())
    dCdt = C * (jnp.dot(R, mu.T, precision=hp) * (1.0 - lam_s)) - C * m[None, :]
    S = jnp.dot(C, mu, precision=hp) * R
    dRdt = rho[None, :] - R * omega[None, :] - S + lam_s * jnp.dot(
        S, l.T, precision=hp)
    dydt = jnp.concatenate([dCdt, dRdt], axis=1)
    return dydt * (ys > 0).astype(jnp.float32)


def euler_reference(ys, mu, lam, m, rho, omega, l, *, N, M, num_steps, dt):
    def step(y, _):
        d = ode_func_reference(y, mu, lam, m, rho, omega, l, N=N, M=M)
        return y + dt * d, None
    y, _ = jax.lax.scan(step, ys, None, length=num_steps)
    return y


def generate_byproduct_matrix(key, M, nonzero_byproduct=0.5):
    num_elements = M * M
    num_nonzeros = int(num_elements * nonzero_byproduct)
    k1, k2 = jax.random.split(key)
    values = jnp.concatenate([
        jax.random.uniform(k1, (num_nonzeros,), dtype=jnp.float32),
        jnp.zeros((num_elements - num_nonzeros,), dtype=jnp.float32),
    ])
    values = jax.random.permutation(k2, values)
    D = values.reshape(M, M)
    col_sums = jnp.sum(D, axis=0)
    col_sums = jnp.where(col_sums == 0, 1.0, col_sums)
    return D / col_sums


if __name__ == "__main__":
    N = 10
    M = 10
    B = 256   # stacked state vectors (the PyTorch loop over ys); grid = 2

    key = jax.random.PRNGKey(0)
    k_mu, k_lam, k_m, k_rho, k_omega, k_l, k_ys = jax.random.split(key, 7)

    # Deterministic synthetic parameters (shapes from ODEFunc.__init__).
    mu = jax.random.uniform(k_mu, (N, M), dtype=jnp.float32)
    lam = jax.random.uniform(k_lam, (1,), dtype=jnp.float32)
    m = jax.random.uniform(k_m, (N,), dtype=jnp.float32)
    rho = jax.random.uniform(k_rho, (M,), dtype=jnp.float32)
    omega = jax.random.uniform(k_omega, (M,), dtype=jnp.float32)
    l = generate_byproduct_matrix(k_l, M, 0.5)
    # NOTE: mu_base / mu_mask are stored in the module but unused in forward().

    # Inputs: subtract 0.3 so the (y > 0) positivity mask is exercised.
    ys = jax.random.uniform(k_ys, (B, N + M), dtype=jnp.float32) - 0.3

    # One-time parameter preparation (hoisted out of the per-step path).
    params = prepare_params(mu, lam, m, rho, omega, l, N=N, M=M)

    # --- single RHS evaluation (== ODEFunc.forward) --------------------------
    fwd = jax.jit(functools.partial(ode_func_forward, N=N, M=M))
    out = jax.block_until_ready(fwd(ys, params))
    ref = ode_func_reference(ys, mu, lam, m, rho, omega, l, N=N, M=M)
    np.testing.assert_allclose(np.asarray(out), np.asarray(ref),
                               rtol=1e-3, atol=1e-3)

    # --- fused multi-step rollout (lane-dense, params resident in VMEM) ------
    num_steps, dt = 16, 0.01
    roll = jax.jit(functools.partial(ode_func_integrate_euler, N=N, M=M,
                                     num_steps=num_steps, dt=dt, unroll=4))
    out_T = jax.block_until_ready(roll(ys, params))
    ref_T = euler_reference(ys, mu, lam, m, rho, omega, l,
                            N=N, M=M, num_steps=num_steps, dt=dt)
    np.testing.assert_allclose(np.asarray(out_T), np.asarray(ref_T),
                               rtol=1e-3, atol=1e-3)

    print("KERNEL_OK")
</pallas_src>

<mosaic_0001>
module attributes {stable_mosaic.version = 11 : i64} {
  func.func @_odefunc_kernel(%arg0: i32, %arg1: memref<128x20xf32, #tpu.memory_space<vmem>>, %arg2: memref<20x20xf32, #tpu.memory_space<vmem>>, %arg3: memref<20x20xf32, #tpu.memory_space<vmem>>, %arg4: memref<1x20xf32, #tpu.memory_space<vmem>>, %arg5: memref<1x20xf32, #tpu.memory_space<vmem>>, %arg6: memref<128x20xf32, #tpu.memory_space<vmem>>) attributes {dimension_semantics = [#tpu.dimension_semantics<parallel>], iteration_bounds = array<i64: 2>, scalar_prefetch = 0 : i64, scratch_operands = 0 : i64, tpu.core_type = #tpu.core_type<tc>, window_params = [{transform_indices = @transform_0, window_bounds = array<i64: 128, 20>}, {pipeline_mode = #tpu.pipeline_mode<synchronous>, transform_indices = @transform_1, window_bounds = array<i64: 20, 20>}, {pipeline_mode = #tpu.pipeline_mode<synchronous>, transform_indices = @transform_2, window_bounds = array<i64: 20, 20>}, {pipeline_mode = #tpu.pipeline_mode<synchronous>, transform_indices = @transform_3, window_bounds = array<i64: 1, 20>}, {pipeline_mode = #tpu.pipeline_mode<synchronous>, transform_indices = @transform_4, window_bounds = array<i64: 1, 20>}, {transform_indices = @transform_5, window_bounds = array<i64: 128, 20>}]} {
    %c0 = arith.constant 0 : index
    %c0_0 = arith.constant 0 : index
    %0 = vector.load %arg1[%c0, %c0_0] : memref<128x20xf32, #tpu.memory_space<vmem>>, vector<128x20xf32>
    %c0_1 = arith.constant 0 : index
    %c0_2 = arith.constant 0 : index
    %1 = vector.load %arg2[%c0_1, %c0_2] : memref<20x20xf32, #tpu.memory_space<vmem>>, vector<20x20xf32>
    %cst = arith.constant dense<0.000000e+00> : vector<128x20xf32>
    %2 = tpu.matmul %0, %1, %cst {dimension_numbers = #tpu.dot_dimension_numbers<[1], [0], [0], [1], [0, 0, 1, 1], [], []>} : vector<128x20xf32>, vector<20x20xf32>, vector<128x20xf32> -> vector<128x20xf32>
    %3 = arith.mulf %2, %0 : vector<128x20xf32>
    %c0_3 = arith.constant 0 : index
    %c0_4 = arith.constant 0 : index
    %4 = vector.load %arg3[%c0_3, %c0_4] : memref<20x20xf32, #tpu.memory_space<vmem>>, vector<20x20xf32>
    %cst_5 = arith.constant dense<0.000000e+00> : vector<128x20xf32>
    %5 = tpu.matmul %3, %4, %cst_5 {dimension_numbers = #tpu.dot_dimension_numbers<[1], [0], [0], [1], [0, 0, 1, 1], [], []>} : vector<128x20xf32>, vector<20x20xf32>, vector<128x20xf32> -> vector<128x20xf32>
    %c0_6 = arith.constant 0 : index
    %c0_7 = arith.constant 0 : index
    %6 = vector.load %arg4[%c0_6, %c0_7] : memref<1x20xf32, #tpu.memory_space<vmem>>, vector<1x20xf32>
    %7 = vector.broadcast %6 : vector<1x20xf32> to vector<128x20xf32>
    %8 = arith.mulf %0, %7 : vector<128x20xf32>
    %9 = arith.subf %5, %8 : vector<128x20xf32>
    %c0_8 = arith.constant 0 : index
    %c0_9 = arith.constant 0 : index
    %10 = vector.load %arg5[%c0_8, %c0_9] : memref<1x20xf32, #tpu.memory_space<vmem>>, vector<1x20xf32>
    %11 = vector.broadcast %10 : vector<1x20xf32> to vector<128x20xf32>
    %12 = arith.addf %9, %11 : vector<128x20xf32>
    %cst_10 = arith.constant 0.000000e+00 : f32
    %13 = vector.broadcast %cst_10 : f32 to vector<128x20xf32>
    %14 = arith.cmpf ogt, %0, %13 : vector<128x20xf32>
    %cst_11 = arith.constant 0.000000e+00 : f32
    %15 = vector.broadcast %cst_11 : f32 to vector<128x20xf32>
    %16 = arith.select %14, %12, %15 : vector<128x20xi1>, vector<128x20xf32>
    %c0_12 = arith.constant 0 : index
    %c0_13 = arith.constant 0 : index
    %17 = vector.load %arg6[%c0_12, %c0_13] : memref<128x20xf32, #tpu.memory_space<vmem>>, vector<128x20xf32>
    tpu.vector_store %arg6[%c0_12, %c0_13], %16 {strides = array<i32>} : memref<128x20xf32, #tpu.memory_space<vmem>>, vector<128x20xf32>,
    return
  }
  func.func @transform_0(%arg0: i32) -> (i32, i32) {
    %c0_i32 = arith.constant 0 : i32
    %c0_i32_0 = arith.constant 0 : i32
    return %arg0, %c0_i32 : i32, i32
  }
  func.func @transform_1(%arg0: i32) -> (i32, i32) {
    %c0_i32 = arith.constant 0 : i32
    %c0_i32_0 = arith.constant 0 : i32
    %c0_i32_1 = arith.constant 0 : i32
    return %c0_i32, %c0_i32_0 : i32, i32
  }
  func.func @transform_2(%arg0: i32) -> (i32, i32) {
    %c0_i32 = arith.constant 0 : i32
    %c0_i32_0 = arith.constant 0 : i32
    %c0_i32_1 = arith.constant 0 : i32
    return %c0_i32, %c0_i32_0 : i32, i32
  }
  func.func @transform_3(%arg0: i32) -> (i32, i32) {
    %c0_i32 = arith.constant 0 : i32
    %c0_i32_0 = arith.constant 0 : i32
    %c0_i32_1 = arith.constant 0 : i32
    return %c0_i32, %c0_i32_0 : i32, i32
  }
  func.func @transform_4(%arg0: i32) -> (i32, i32) {
    %c0_i32 = arith.constant 0 : i32
    %c0_i32_0 = arith.constant 0 : i32
    %c0_i32_1 = arith.constant 0 : i32
    return %c0_i32, %c0_i32_0 : i32, i32
  }
  func.func @transform_5(%arg0: i32) -> (i32, i32) {
    %c0_i32 = arith.constant 0 : i32
    %c0_i32_0 = arith.constant 0 : i32
    return %arg0, %c0_i32 : i32, i32
  }
}

</mosaic_0001>

<llo_original>
// kernel: ode_func_forward.1
$region0: #{ode_func_forward.1}
  #allocation0 [shape = 'u32[]', space=smem, size = 0x4, offset = 0x4, fixed_abs, tag = 'smem constant byte address 0x4 - core index']
  #allocation1 [shape = 'u32[144,128]{1,0:T(1,128)}', space=vmem, size = 0x12000, scoped, tag = 'internal scratch']
  %s0 = inlined_call_operand.vmem [shape: f32[256,20], index: 0, kind: input, shape index: {}]
  %s1 = inlined_call_operand.vmem [shape: f32[20,20], index: 1, kind: input, shape index: {}]
  %s2 = inlined_call_operand.vmem [shape: f32[20,20], index: 2, kind: input, shape index: {}]
  %s3 = inlined_call_operand.vmem [shape: f32[1,20], index: 3, kind: input, shape index: {}]
  %s4 = inlined_call_operand.vmem [shape: f32[1,20], index: 4, kind: input, shape index: {}]
  %s5 = inlined_call_operand.vmem [shape: f32[256,20], index: 5, kind: output, shape index: {}]
  %s6 = sld [smem:[#allocation0]]
  $region53: #{ode_func_forward.1} parent=0
    _
  %s8 = ssub.s32 1, %s6
  %s9 = scalar_select 0, %s8, %s6
  loop: start=0, step=1, limit=4
  $region2: #{ode_func_forward.1} parent=0 // loop_pre_header
    _
  $region3: #{ode_func_forward.1} parent=0 // loop_header
    %s11 = sphi 0, %s15
    %p12 = scmp.ge.s32.totalorder %s11, 4
    %s21 = sphi 0, %s23
    %s24 = sphi 0, %s21
    %s25 = sphi 0, %s24
    %s41 = sphi 0, %s25
    %s45 = sphi 0, %s45
    %s47 = sphi 0, %s45
    %s48 = sphi 0, %s47
    %s62 = sphi 0, %s48
    %s66 = sphi 0, %s66
    %s68 = sphi 0, %s66
    %s69 = sphi 0, %s68
    %s83 = sphi 0, %s69
    %s87 = sphi 0, %s87
    %s89 = sphi 0, %s87
    %s90 = sphi 0, %s89
    %s104 = sphi 0, %s90
    %s108 = sphi 0, %s108
    %s110 = sphi 0, %s108
    %s111 = sphi 0, %s110
    %s125 = sphi 0, %s111
    %s131 = sphi 0, %s133
    %s134 = sphi 0, %s131
    %s135 = sphi 0, %s134
    %s151 = sphi 0, %s135
  $region4: #{ode_func_forward.1} parent=0 // loop_header_branch
    %14 = sbr.rel (%p12) target = $region8
  $region5: #{ode_func_forward.1} parent=0 // loop_body
    %s16 = ssub.s32 %s11, 1
    %s17 = ssub.s32 %s11, 2
    %s18 = sadd.s32 %s11, 1
    %s19 = ssub.s32 %s11, %s18
    %p20 = scmp.eq.s32.totalorder %s19, 0
    %s22 = sadd.s32 %s21, 1
    %s23 = scalar_select %p20, %s21, %s22
    %p26 = pneg %p20
    %p27 = scmp.eq.s32.totalorder %s11, 1
    %p28 = por %p26, %p27
    %p29 = scmp.ne.s32.totalorder %s21, %s24
    %p30 = scmp.eq.s32.totalorder %s11, 0
    %p31 = por %p29, %p30
    %p32 = scmp.ne.s32.totalorder %s21, %s24
    %p33 = scmp.eq.s32.totalorder %s16, 1
    %p34 = por %p32, %p33
    %p35 = scmp.ne.s32.totalorder %s24, %s25
    %p36 = scmp.eq.s32.totalorder %s16, 0
    %p37 = por %p35, %p36
    %p38 = scmp.ne.s32.totalorder %s24, %s25
    %p39 = scmp.eq.s32.totalorder %s17, 1
    %p40 = por %p38, %p39
    %p42 = scmp.ne.s32.totalorder %s25, %s41
    %p43 = scmp.eq.s32.totalorder %s17, 0
    %p44 = por %p42, %p43
    %s46 = sadd.s32 %s45, 1
    %p49 = scmp.eq.s32.totalorder %s11, 1
    %p50 = scmp.ne.s32.totalorder %s45, %s47
    %p51 = scmp.eq.s32.totalorder %s11, 0
    %p52 = por %p50, %p51
    %p53 = scmp.ne.s32.totalorder %s45, %s47
    %p54 = scmp.eq.s32.totalorder %s16, 1
    %p55 = por %p53, %p54
    %p56 = scmp.ne.s32.totalorder %s47, %s48
    %p57 = scmp.eq.s32.totalorder %s16, 0
    %p58 = por %p56, %p57
    %p59 = scmp.ne.s32.totalorder %s47, %s48
    %p60 = scmp.eq.s32.totalorder %s17, 1
    %p61 = por %p59, %p60
    %p63 = scmp.ne.s32.totalorder %s48, %s62
    %p64 = scmp.eq.s32.totalorder %s17, 0
    %p65 = por %p63, %p64
    %s67 = sadd.s32 %s66, 1
    %p70 = scmp.eq.s32.totalorder %s11, 1
    %p71 = scmp.ne.s32.totalorder %s66, %s68
    %p72 = scmp.eq.s32.totalorder %s11, 0
    %p73 = por %p71, %p72
    %p74 = scmp.ne.s32.totalorder %s66, %s68
    %p75 = scmp.eq.s32.totalorder %s16, 1
    %p76 = por %p74, %p75
    %p77 = scmp.ne.s32.totalorder %s68, %s69
    %p78 = scmp.eq.s32.totalorder %s16, 0
    %p79 = por %p77, %p78
    %p80 = scmp.ne.s32.totalorder %s68, %s69
    %p81 = scmp.eq.s32.totalorder %s17, 1
    %p82 = por %p80, %p81
    %p84 = scmp.ne.s32.totalorder %s69, %s83
    %p85 = scmp.eq.s32.totalorder %s17, 0
    %p86 = por %p84, %p85
    %s88 = sadd.s32 %s87, 1
    %p91 = scmp.eq.s32.totalorder %s11, 1
    %p92 = scmp.ne.s32.totalorder %s87, %s89
    %p93 = scmp.eq.s32.totalorder %s11, 0
    %p94 = por %p92, %p93
    %p95 = scmp.ne.s32.totalorder %s87, %s89
    %p96 = scmp.eq.s32.totalorder %s16, 1
    %p97 = por %p95, %p96
    %p98 = scmp.ne.s32.totalorder %s89, %s90
    %p99 = scmp.eq.s32.totalorder %s16, 0
    %p100 = por %p98, %p99
    %p101 = scmp.ne.s32.totalorder %s89, %s90
    %p102 = scmp.eq.s32.totalorder %s17, 1
    %p103 = por %p101, %p102
    %p105 = scmp.ne.s32.totalorder %s90, %s104
    %p106 = scmp.eq.s32.totalorder %s17, 0
    %p107 = por %p105, %p106
    %s109 = sadd.s32 %s108, 1
    %p112 = scmp.eq.s32.totalorder %s11, 1
    %p113 = scmp.ne.s32.totalorder %s108, %s110
    %p114 = scmp.eq.s32.totalorder %s11, 0
    %p115 = por %p113, %p114
    %p116 = scmp.ne.s32.totalorder %s108, %s110
    %p117 = scmp.eq.s32.totalorder %s16, 1
    %p118 = por %p116, %p117
    %p119 = scmp.ne.s32.totalorder %s110, %s111
    %p120 = scmp.eq.s32.totalorder %s16, 0
    %p121 = por %p119, %p120
    %p122 = scmp.ne.s32.totalorder %s110, %s111
    %p123 = scmp.eq.s32.totalorder %s17, 1
    %p124 = por %p122, %p123
    %p126 = scmp.ne.s32.totalorder %s111, %s125
    %p127 = scmp.eq.s32.totalorder %s17, 0
    %p128 = por %p126, %p127
    %s129 = ssub.s32 %s11, %s18
    %p130 = scmp.eq.s32.totalorder %s129, 0
    %s132 = sadd.s32 %s131, 1
    %s133 = scalar_select %p130, %s131, %s132
    %p136 = pneg %p130
    %p137 = scmp.eq.s32.totalorder %s11, 1
    %p138 = por %p136, %p137
    %p139 = scmp.ne.s32.totalorder %s131, %s134
    %p140 = scmp.eq.s32.totalorder %s11, 0
    %p141 = por %p139, %p140
    %p142 = scmp.ne.s32.totalorder %s131, %s134
    %p143 = scmp.eq.s32.totalorder %s16, 1
    %p144 = por %p142, %p143
    %p145 = scmp.ne.s32.totalorder %s134, %s135
    %p146 = scmp.eq.s32.totalorder %s16, 0
    %p147 = por %p145, %p146
    %p148 = scmp.ne.s32.totalorder %s134, %s135
    %p149 = scmp.eq.s32.totalorder %s17, 1
    %p150 = por %p148, %p149
    %p152 = scmp.ne.s32.totalorder %s135, %s151
    %p153 = scmp.eq.s32.totalorder %s17, 0
    %p154 = por %p152, %p153
    %p155 = scmp.le.s32.totalorder 1, %s11
    %p156 = scmp.lt.s32.totalorder %s11, 3
    %p157 = pnand %p155, %p156
    %p158 = pneg %p157
    // Predicated region
    $region9: #{ode_func_forward.1} parent=5 // pred_check
      _
    $region10: #{ode_func_forward.1} parent=5 // pred_check_branch
      %160 = sbr.rel (%p157) target = $region12
    $region11: #{ode_func_forward.1} parent=5 // pred_region
      %s161 = ssub.s32 %s11, 1
      // Predicated region
      $region13: #{ode_func_forward.1} parent=11 // pred_check
        %p162 = pneg %p58
      $region14: #{ode_func_forward.1} parent=11 // pred_check_branch
        %164 = sbr.rel (%p162) target = $region16
      $region15: #{ode_func_forward.1} parent=11 // pred_region
        _
      $region16: #{ode_func_forward.1} parent=11 // pred_fallthru
        _
      // Predicated region
      $region17: #{ode_func_forward.1} parent=11 // pred_check
        %p165 = pneg %p79
      $region18: #{ode_func_forward.1} parent=11 // pred_check_branch
        %167 = sbr.rel (%p165) target = $region20
      $region19: #{ode_func_forward.1} parent=11 // pred_region
        _
      $region20: #{ode_func_forward.1} parent=11 // pred_fallthru
        _
      // Predicated region
      $region21: #{ode_func_forward.1} parent=11 // pred_check
        %p168 = pneg %p100
      $region22: #{ode_func_forward.1} parent=11 // pred_check_branch
        %170 = sbr.rel (%p168) target = $region24
      $region23: #{ode_func_forward.1} parent=11 // pred_region
        _
      $region24: #{ode_func_forward.1} parent=11 // pred_fallthru
        _
      // Predicated region
      $region25: #{ode_func_forward.1} parent=11 // pred_check
        %p171 = pneg %p121
      $region26: #{ode_func_forward.1} parent=11 // pred_check_branch
        %173 = sbr.rel (%p171) target = $region28
      $region27: #{ode_func_forward.1} parent=11 // pred_region
        _
      $region28: #{ode_func_forward.1} parent=11 // pred_fallthru
        _
    $region12: #{ode_func_forward.1} parent=5 // pred_fallthru
      _
    %p174 = scmp.lt.s32.totalorder %s11, 2
    // Predicated region
    $region29: #{ode_func_forward.1} parent=5 // pred_check
      %p175 = pneg %p174
    $region30: #{ode_func_forward.1} parent=5 // pred_check_branch
      %177 = sbr.rel (%p175) target = $region32
    $region31: #{ode_func_forward.1} parent=5 // pred_region
      // Predicated region
      $region33: #{ode_func_forward.1} parent=31 // pred_check
        %p178 = pneg %p31
      $region34: #{ode_func_forward.1} parent=31 // pred_check_branch
        %180 = sbr.rel (%p178) target = $region36
      $region35: #{ode_func_forward.1} parent=31 // pred_region
        %s181 = smul.u32 16, %s11
        %p182 = scmp.lt.s32.totalorder %s181, 31
        %s183 = scalar_select %p182, %s181, 31
        %s184 = smul.addr %s183, 8
        %s185 = scalar_lea.vmem %s0, %s184
        %s186 = smul.u32 16, %s11
      $region36: #{ode_func_forward.1} parent=31 // pred_fallthru
        _
    $region32: #{ode_func_forward.1} parent=5 // pred_fallthru
      _
    %p187 = scmp.le.s32.totalorder 1, %s11
    %p188 = scmp.lt.s32.totalorder %s11, 3
    %p189 = pnand %p187, %p188
    %p190 = pneg %p189
    // Predicated region
    $region37: #{ode_func_forward.1} parent=5 // pred_check
      _
    $region38: #{ode_func_forward.1} parent=5 // pred_check_branch
      %192 = sbr.rel (%p189) target = $region40
    $region39: #{ode_func_forward.1} parent=5 // pred_region
      %s193 = ssub.s32 %s11, 1
      %s194 = smul.u32 16, %s16
      %p195 = scmp.lt.s32.totalorder %s194, 31
      %s196 = scalar_select %p195, %s194, 31
      %s197 = smul.addr %s196, 8
      %s198 = scalar_lea.vmem %s0, %s197
      %p199 = pneg %p37
      %p200 = pneg %p34
      %p201 = pneg %p58
      %p202 = pneg %p55
      %p203 = pneg %p79
      %p204 = pneg %p76
      %p205 = pneg %p100
      %p206 = pneg %p97
      %p207 = pneg %p121
      %p208 = pneg %p118
      %p209 = pneg %p147
      %p210 = pneg %p144
      %s211 = smul.u32 16, %s16
      %p212 = scmp.lt.s32.totalorder %s211, 31
      %s213 = scalar_select %p212, %s211, 31
      %s214 = smul.addr %s213, 8
      %s215 = scalar_lea.vmem %s5, %s214
      %s216 = smul.u32 16, %s16
      %p217 = scmp.lt.s32.totalorder %s216, 31
      %s218 = scalar_select %p217, %s216, 31
      %s219 = smul.addr %s218, 8
      %s220 = scalar_lea.vmem %s0, %s219
      %s221 = smul.u32 16, %s16
      %s222 = smul.u32 16, %s16
      %p223 = scmp.lt.s32.totalorder %s222, 31
      %s224 = scalar_select %p223, %s222, 31
      %s225 = smul.addr %s224, 8
      %s226 = scalar_lea.vmem %s5, %s225
      %s227 = smul.u32 16, %s16
      %v228 = vld [vmem:[%s220] sm:$0xff]
      %v229 = vld [vmem:[%s220 + $0x8] sm:$0xff]
      %v230 = vld [vmem:[%s220 + $0x10] sm:$0xff]
      %v231 = vld [vmem:[%s220 + $0x18] sm:$0xff]
      %v232 = vld [vmem:[%s220 + $0x20] sm:$0xff]
      %v233 = vld [vmem:[%s220 + $0x28] sm:$0xff]
      %v234 = vld [vmem:[%s220 + $0x30] sm:$0xff]
      %v235 = vld [vmem:[%s220 + $0x38] sm:$0xff]
      %v236 = vld [vmem:[%s220 + $0x40] sm:$0xff]
      %v237 = vld [vmem:[%s220 + $0x48] sm:$0xff]
      %v238 = vld [vmem:[%s220 + $0x50] sm:$0xff]
      %v239 = vld [vmem:[%s220 + $0x58] sm:$0xff]
      %v240 = vld [vmem:[%s220 + $0x60] sm:$0xff]
      %v241 = vld [vmem:[%s220 + $0x68] sm:$0xff]
      %v242 = vld [vmem:[%s220 + $0x70] sm:$0xff]
      %v243 = vld [vmem:[%s220 + $0x78] sm:$0xff]
      %v244 = vld [vmem:[%s1] sm:$0xff]
      %v245 = vld [vmem:[%s1 + $0x8] sm:$0xff]
      %v246 = vld [vmem:[%s1 + $0x10] sm:$0xf]
      %vm247 = vcmask 162816
      %v249 = vsel %vm247, %v228, 0
      %v252 = vsel %vm247, %v229, 0
      %v255 = vsel %vm247, %v230, 0
      %v258 = vsel %vm247, %v231, 0
      %v261 = vsel %vm247, %v232, 0
      %v264 = vsel %vm247, %v233, 0
      %v267 = vsel %vm247, %v234, 0
      %v270 = vsel %vm247, %v235, 0
      %v273 = vsel %vm247, %v236, 0
      %v276 = vsel %vm247, %v237, 0
      %v279 = vsel %vm247, %v238, 0
      %v282 = vsel %vm247, %v239, 0
      %v285 = vsel %vm247, %v240, 0
      %v288 = vsel %vm247, %v241, 0
      %v291 = vsel %vm247, %v242, 0
      %v294 = vsel %vm247, %v243, 0
      %vm296 = vcmask 1043456
      %v298 = vsel %vm296, %v246, 0
      %300 = vmatprep.subr.mxu0 0.0
      %301 = vmatpush1.msra.mxu0 0.0
      %302 = vmatprep.subr.mxu0 0.0
      %303 = vmatpush1.msra.mxu0 0.0
      %304 = vmatprep.subr.mxu0 0.0
      %305 = vmatpush1.msra.mxu0 0.0
      %306 = vmatprep.subr.mxu0 0.0
      %307 = vmatpush1.msra.mxu0 0.0
      %308 = vmatprep.subr.mxu0 0.0
      %309 = vmatpush1.msra.mxu0 0.0
      %310 = vmatprep.subr.mxu0 0.0
      %311 = vmatpush1.msra.mxu0 0.0
      %312 = vmatprep.subr.mxu0 0.0
      %313 = vmatpush1.msra.mxu0 0.0
      %314 = vmatprep.subr.mxu0 0.0
      %315 = vmatpush1.msra.mxu0 0.0
      %316 = vmatprep.subr.mxu0 0.0
      %317 = vmatpush1.msra.mxu0 0.0
      %318 = vmatprep.subr.mxu0 0.0
      %319 = vmatpush1.msra.mxu0 0.0
      %320 = vmatprep.subr.mxu0 0.0
      %321 = vmatpush1.msra.mxu0 0.0
      %322 = vmatprep.subr.mxu0 0.0
      %323 = vmatpush1.msra.mxu0 0.0
      %324 = vmatprep.subr.mxu0 0.0
      %325 = vmatpush1.msra.mxu0 0.0
      %326 = vmatprep.subr.mxu0 0.0
      %327 = vmatpush1.msra.mxu0 %v298
      %328 = vmatprep.subr.mxu0 0.0
      %329 = vmatpush1.msra.mxu0 %v245
      %330 = vmatprep.subr.mxu0 0.0
      %331 = vmatpush1.msra.mxu0 %v244
      %332 = vmatprep.subr.mxu0 0.0
      %333 = vmatpush2.msra.mxu0 0.0
      %334 = vmatprep.subr.mxu0 0.0
      %335 = vmatpush2.msra.mxu0 0.0
      %336 = vmatprep.subr.mxu0 0.0
      %337 = vmatpush2.msra.mxu0 0.0
      %338 = vmatprep.subr.mxu0 0.0
      %339 = vmatpush2.msra.mxu0 0.0
      %340 = vmatprep.subr.mxu0 0.0
      %341 = vmatpush2.msra.mxu0 0.0
      %342 = vmatprep.subr.mxu0 0.0
      %343 = vmatpush2.msra.mxu0 0.0
      %344 = vmatprep.subr.mxu0 0.0
      %345 = vmatpush2.msra.mxu0 0.0
      %346 = vmatprep.subr.mxu0 0.0
      %347 = vmatpush2.msra.mxu0 0.0
      %348 = vmatprep.subr.mxu0 0.0
      %349 = vmatpush2.msra.mxu0 0.0
      %350 = vmatprep.subr.mxu0 0.0
      %351 = vmatpush2.msra.mxu0 0.0
      %352 = vmatprep.subr.mxu0 0.0
      %353 = vmatpush2.msra.mxu0 0.0
      %354 = vmatprep.subr.mxu0 0.0
      %355 = vmatpush2.msra.mxu0 0.0
      %356 = vmatprep.subr.mxu0 0.0
      %357 = vmatpush2.msra.mxu0 0.0
      %358 = vmatprep.subr.mxu0 0.0
      %359 = vmatpush2.msra.mxu0 0.0
      %360 = vmatprep.subr.mxu0 0.0
      %361 = vmatpush2.msra.mxu0 0.0
      %362 = vmatprep.subr.mxu0 0.0
      %363 = vmatpush2.msra.mxu0 0.0
      %364 = vmatprep.mubr.f32.mxu0 0.0
      %365 = vmatmul.mubr.f32.gmra.mxu0 %v249
      %v366 = vpop.f32.mrf.mxu0
      %v367 = vadd.f32 0.0, %v366
      %v368 = vpop.f32.mrf.mxu0
      %369 = vmatprep.mubr.f32.mxu0 0.0
      %370 = vmatmul.mubr.f32.gmra.mxu0 %v252
      %v371 = vpop.f32.mrf.mxu0
      %v372 = vadd.f32 0.0, %v371
      %v373 = vpop.f32.mrf.mxu0
      %374 = vmatprep.mubr.f32.mxu0 0.0
      %375 = vmatmul.mubr.f32.gmra.mxu0 %v255
      %v376 = vpop.f32.mrf.mxu0
      %v377 = vadd.f32 0.0, %v376
      %v378 = vpop.f32.mrf.mxu0
      %379 = vmatprep.mubr.f32.mxu0 0.0
      %380 = vmatmul.mubr.f32.gmra.mxu0 %v258
      %v381 = vpop.f32.mrf.mxu0
      %v382 = vadd.f32 0.0, %v381
      %v383 = vpop.f32.mrf.mxu0
      %384 = vmatprep.mubr.f32.mxu0 0.0
      %385 = vmatmul.mubr.f32.gmra.mxu0 %v261
      %v386 = vpop.f32.mrf.mxu0
      %v387 = vadd.f32 0.0, %v386
      %v388 = vpop.f32.mrf.mxu0
      %389 = vmatprep.mubr.f32.mxu0 0.0
      %390 = vmatmul.mubr.f32.gmra.mxu0 %v264
      %v391 = vpop.f32.mrf.mxu0
      %v392 = vadd.f32 0.0, %v391
      %v393 = vpop.f32.mrf.mxu0
      %394 = vmatprep.mubr.f32.mxu0 0.0
      %395 = vmatmul.mubr.f32.gmra.mxu0 %v267
      %v396 = vpop.f32.mrf.mxu0
      %v397 = vadd.f32 0.0, %v396
      %v398 = vpop.f32.mrf.mxu0
      %399 = vmatprep.mubr.f32.mxu0 0.0
      %400 = vmatmul.mubr.f32.gmra.mxu0 %v270
      %v401 = vpop.f32.mrf.mxu0
      %v402 = vadd.f32 0.0, %v401
      %v403 = vpop.f32.mrf.mxu0
      %404 = vmatprep.mubr.f32.mxu0 0.0
      %405 = vmatmul.mubr.f32.gmra.mxu0 %v273
      %v406 = vpop.f32.mrf.mxu0
      %v407 = vadd.f32 0.0, %v406
      %v408 = vpop.f32.mrf.mxu0
      %409 = vmatprep.mubr.f32.mxu0 0.0
      %410 = vmatmul.mubr.f32.gmra.mxu0 %v276
      %v411 = vpop.f32.mrf.mxu0
      %v412 = vadd.f32 0.0, %v411
      %v413 = vpop.f32.mrf.mxu0
      %414 = vmatprep.mubr.f32.mxu0 0.0
      %415 = vmatmul.mubr.f32.gmra.mxu0 %v279
      %v416 = vpop.f32.mrf.mxu0
      %v417 = vadd.f32 0.0, %v416
      %v418 = vpop.f32.mrf.mxu0
      %419 = vmatprep.mubr.f32.mxu0 0.0
      %420 = vmatmul.mubr.f32.gmra.mxu0 %v282
      %v421 = vpop.f32.mrf.mxu0
      %v422 = vadd.f32 0.0, %v421
      %v423 = vpop.f32.mrf.mxu0
      %424 = vmatprep.mubr.f32.mxu0 0.0
      %425 = vmatmul.mubr.f32.gmra.mxu0 %v285
      %v426 = vpop.f32.mrf.mxu0
      %v427 = vadd.f32 0.0, %v426
      %v428 = vpop.f32.mrf.mxu0
      %429 = vmatprep.mubr.f32.mxu0 0.0
      %430 = vmatmul.mubr.f32.gmra.mxu0 %v288
      %v431 = vpop.f32.mrf.mxu0
      %v432 = vadd.f32 0.0, %v431
      %v433 = vpop.f32.mrf.mxu0
      %434 = vmatprep.mubr.f32.mxu0 0.0
      %435 = vmatmul.mubr.f32.gmra.mxu0 %v291
      %v436 = vpop.f32.mrf.mxu0
      %v437 = vadd.f32 0.0, %v436
      %v438 = vpop.f32.mrf.mxu0
      %439 = vmatprep.mubr.f32.mxu0 0.0
      %440 = vmatmul.mubr.f32.gmra.mxu0 %v294
      %v441 = vpop.f32.mrf.mxu0
      %v442 = vadd.f32 0.0, %v441
      %v443 = vpop.f32.mrf.mxu0
      %444 = vdwg.mxu0
      %v445 = vmul.f32 %v367, %v228
      %v446 = vmul.f32 %v372, %v229
      %v447 = vmul.f32 %v377, %v230
      %v448 = vmul.f32 %v382, %v231
      %v449 = vmul.f32 %v387, %v232
      %v450 = vmul.f32 %v392, %v233
      %v451 = vmul.f32 %v397, %v234
      %v452 = vmul.f32 %v402, %v235
      %v453 = vmul.f32 %v407, %v236
      %v454 = vmul.f32 %v412, %v237
      %v455 = vmul.f32 %v417, %v238
      %v456 = vmul.f32 %v422, %v239
      %v457 = vmul.f32 %v427, %v240
      %v458 = vmul.f32 %v432, %v241
      %v459 = vmul.f32 %v437, %v242
      %v460 = vmul.f32 %v442, %v243
      %v461 = vld [vmem:[%s2] sm:$0xff]
      %v462 = vld [vmem:[%s2 + $0x8] sm:$0xff]
      %v463 = vld [vmem:[%s2 + $0x10] sm:$0xf]
      %v465 = vsel %vm247, %v445, 0
      %v468 = vsel %vm247, %v446, 0
      %v471 = vsel %vm247, %v447, 0
      %v474 = vsel %vm247, %v448, 0
      %v477 = vsel %vm247, %v449, 0
      %v480 = vsel %vm247, %v450, 0
      %v483 = vsel %vm247, %v451, 0
      %v486 = vsel %vm247, %v452, 0
      %v489 = vsel %vm247, %v453, 0
      %v492 = vsel %vm247, %v454, 0
      %v495 = vsel %vm247, %v455, 0
      %v498 = vsel %vm247, %v456, 0
      %v501 = vsel %vm247, %v457, 0
      %v504 = vsel %vm247, %v458, 0
      %v507 = vsel %vm247, %v459, 0
      %v510 = vsel %vm247, %v460, 0
      %v513 = vsel %vm296, %v463, 0
      %515 = vmatprep.subr.mxu0 0.0
      %516 = vmatpush1.msra.mxu0 0.0
      %517 = vmatprep.subr.mxu0 0.0
      %518 = vmatpush1.msra.mxu0 0.0
      %519 = vmatprep.subr.mxu0 0.0
      %520 = vmatpush1.msra.mxu0 0.0
      %521 = vmatprep.subr.mxu0 0.0
      %522 = vmatpush1.msra.mxu0 0.0
      %523 = vmatprep.subr.mxu0 0.0
      %524 = vmatpush1.msra.mxu0 0.0
      %525 = vmatprep.subr.mxu0 0.0
      %526 = vmatpush1.msra.mxu0 0.0
      %527 = vmatprep.subr.mxu0 0.0
      %528 = vmatpush1.msra.mxu0 0.0
      %529 = vmatprep.subr.mxu0 0.0
      %530 = vmatpush1.msra.mxu0 0.0
      %531 = vmatprep.subr.mxu0 0.0
      %532 = vmatpush1.msra.mxu0 0.0
      %533 = vmatprep.subr.mxu0 0.0
      %534 = vmatpush1.msra.mxu0 0.0
      %535 = vmatprep.subr.mxu0 0.0
      %536 = vmatpush1.msra.mxu0 0.0
      %537 = vmatprep.subr.mxu0 0.0
      %538 = vmatpush1.msra.mxu0 0.0
      %539 = vmatprep.subr.mxu0 0.0
      %540 = vmatpush1.msra.mxu0 0.0
      %541 = vmatprep.subr.mxu0 0.0
      %542 = vmatpush1.msra.mxu0 %v513
      %543 = vmatprep.subr.mxu0 0.0
      %544 = vmatpush1.msra.mxu0 %v462
      %545 = vmatprep.subr.mxu0 0.0
      %546 = vmatpush1.msra.mxu0 %v461
      %547 = vmatprep.subr.mxu0 0.0
      %548 = vmatpush2.msra.mxu0 0.0
      %549 = vmatprep.subr.mxu0 0.0
      %550 = vmatpush2.msra.mxu0 0.0
      %551 = vmatprep.subr.mxu0 0.0
      %552 = vmatpush2.msra.mxu0 0.0
      %553 = vmatprep.subr.mxu0 0.0
      %554 = vmatpush2.msra.mxu0 0.0
      %555 = vmatprep.subr.mxu0 0.0
      %556 = vmatpush2.msra.mxu0 0.0
      %557 = vmatprep.subr.mxu0 0.0
      %558 = vmatpush2.msra.mxu0 0.0
      %559 = vmatprep.subr.mxu0 0.0
      %560 = vmatpush2.msra.mxu0 0.0
      %561 = vmatprep.subr.mxu0 0.0
      %562 = vmatpush2.msra.mxu0 0.0
      %563 = vmatprep.subr.mxu0 0.0
      %564 = vmatpush2.msra.mxu0 0.0
      %565 = vmatprep.subr.mxu0 0.0
      %566 = vmatpush2.msra.mxu0 0.0
      %567 = vmatprep.subr.mxu0 0.0
      %568 = vmatpush2.msra.mxu0 0.0
      %569 = vmatprep.subr.mxu0 0.0
      %570 = vmatpush2.msra.mxu0 0.0
      %571 = vmatprep.subr.mxu0 0.0
      %572 = vmatpush2.msra.mxu0 0.0
      %573 = vmatprep.subr.mxu0 0.0
      %574 = vmatpush2.msra.mxu0 0.0
      %575 = vmatprep.subr.mxu0 0.0
      %576 = vmatpush2.msra.mxu0 0.0
      %577 = vmatprep.subr.mxu0 0.0
      %578 = vmatpush2.msra.mxu0 0.0
      %579 = vmatprep.mubr.f32.mxu0 0.0
      %580 = vmatmul.mubr.f32.gmra.mxu0 %v465
      %v581 = vpop.f32.mrf.mxu0
      %v582 = vadd.f32 0.0, %v581
      %v583 = vpop.f32.mrf.mxu0
      %584 = vmatprep.mubr.f32.mxu0 0.0
      %585 = vmatmul.mubr.f32.gmra.mxu0 %v468
      %v586 = vpop.f32.mrf.mxu0
      %v587 = vadd.f32 0.0, %v586
      %v588 = vpop.f32.mrf.mxu0
      %589 = vmatprep.mubr.f32.mxu0 0.0
      %590 = vmatmul.mubr.f32.gmra.mxu0 %v471
      %v591 = vpop.f32.mrf.mxu0
      %v592 = vadd.f32 0.0, %v591
      %v593 = vpop.f32.mrf.mxu0
      %594 = vmatprep.mubr.f32.mxu0 0.0
      %595 = vmatmul.mubr.f32.gmra.mxu0 %v474
      %v596 = vpop.f32.mrf.mxu0
      %v597 = vadd.f32 0.0, %v596
      %v598 = vpop.f32.mrf.mxu0
      %599 = vmatprep.mubr.f32.mxu0 0.0
      %600 = vmatmul.mubr.f32.gmra.mxu0 %v477
      %v601 = vpop.f32.mrf.mxu0
      %v602 = vadd.f32 0.0, %v601
      %v603 = vpop.f32.mrf.mxu0
      %604 = vmatprep.mubr.f32.mxu0 0.0
      %605 = vmatmul.mubr.f32.gmra.mxu0 %v480
      %v606 = vpop.f32.mrf.mxu0
      %v607 = vadd.f32 0.0, %v606
      %v608 = vpop.f32.mrf.mxu0
      %609 = vmatprep.mubr.f32.mxu0 0.0
      %610 = vmatmul.mubr.f32.gmra.mxu0 %v483
      %v611 = vpop.f32.mrf.mxu0
      %v612 = vadd.f32 0.0, %v611
      %v613 = vpop.f32.mrf.mxu0
      %614 = vmatprep.mubr.f32.mxu0 0.0
      %615 = vmatmul.mubr.f32.gmra.mxu0 %v486
      %v616 = vpop.f32.mrf.mxu0
      %v617 = vadd.f32 0.0, %v616
      %v618 = vpop.f32.mrf.mxu0
      %619 = vmatprep.mubr.f32.mxu0 0.0
      %620 = vmatmul.mubr.f32.gmra.mxu0 %v489
      %v621 = vpop.f32.mrf.mxu0
      %v622 = vadd.f32 0.0, %v621
      %v623 = vpop.f32.mrf.mxu0
      %624 = vmatprep.mubr.f32.mxu0 0.0
      %625 = vmatmul.mubr.f32.gmra.mxu0 %v492
      %v626 = vpop.f32.mrf.mxu0
      %v627 = vadd.f32 0.0, %v626
      %v628 = vpop.f32.mrf.mxu0
      %629 = vmatprep.mubr.f32.mxu0 0.0
      %630 = vmatmul.mubr.f32.gmra.mxu0 %v495
      %v631 = vpop.f32.mrf.mxu0
      %v632 = vadd.f32 0.0, %v631
      %v633 = vpop.f32.mrf.mxu0
      %634 = vmatprep.mubr.f32.mxu0 0.0
      %635 = vmatmul.mubr.f32.gmra.mxu0 %v498
      %v636 = vpop.f32.mrf.mxu0
      %v637 = vadd.f32 0.0, %v636
      %v638 = vpop.f32.mrf.mxu0
      %639 = vmatprep.mubr.f32.mxu0 0.0
      %640 = vmatmul.mubr.f32.gmra.mxu0 %v501
      %v641 = vpop.f32.mrf.mxu0
      %v642 = vadd.f32 0.0, %v641
      %v643 = vpop.f32.mrf.mxu0
      %644 = vmatprep.mubr.f32.mxu0 0.0
      %645 = vmatmul.mubr.f32.gmra.mxu0 %v504
      %v646 = vpop.f32.mrf.mxu0
      %v647 = vadd.f32 0.0, %v646
      %v648 = vpop.f32.mrf.mxu0
      %649 = vmatprep.mubr.f32.mxu0 0.0
      %650 = vmatmul.mubr.f32.gmra.mxu0 %v507
      %v651 = vpop.f32.mrf.mxu0
      %v652 = vadd.f32 0.0, %v651
      %v653 = vpop.f32.mrf.mxu0
      %654 = vmatprep.mubr.f32.mxu0 0.0
      %655 = vmatmul.mubr.f32.gmra.mxu0 %v510
      %v656 = vpop.f32.mrf.mxu0
      %v657 = vadd.f32 0.0, %v656
      %v658 = vpop.f32.mrf.mxu0
      %659 = vdwg.mxu0
      %v660 = vld [vmem:[%s3] sm:$0x1]
      %v662 = vlaneseq
      %v663 = vshrl.u32 %v662, 7
      %v664 = vsub.s32 0, %v663
      %v665 = vrot.slane %v660, %v664
      %v667 = vmul.f32 %v228, %v665
      %v668 = vmul.f32 %v229, %v665
      %v669 = vmul.f32 %v230, %v665
      %v670 = vmul.f32 %v231, %v665
      %v671 = vmul.f32 %v232, %v665
      %v672 = vmul.f32 %v233, %v665
      %v673 = vmul.f32 %v234, %v665
      %v674 = vmul.f32 %v235, %v665
      %v675 = vmul.f32 %v236, %v665
      %v676 = vmul.f32 %v237, %v665
      %v677 = vmul.f32 %v238, %v665
      %v678 = vmul.f32 %v239, %v665
      %v679 = vmul.f32 %v240, %v665
      %v680 = vmul.f32 %v241, %v665
      %v681 = vmul.f32 %v242, %v665
      %v682 = vmul.f32 %v243, %v665
      %v683 = vsub.f32 %v582, %v667
      %v684 = vsub.f32 %v587, %v668
      %v685 = vsub.f32 %v592, %v669
      %v686 = vsub.f32 %v597, %v670
      %v687 = vsub.f32 %v602, %v671
      %v688 = vsub.f32 %v607, %v672
      %v689 = vsub.f32 %v612, %v673
      %v690 = vsub.f32 %v617, %v674
      %v691 = vsub.f32 %v622, %v675
      %v692 = vsub.f32 %v627, %v676
      %v693 = vsub.f32 %v632, %v677
      %v694 = vsub.f32 %v637, %v678
      %v695 = vsub.f32 %v642, %v679
      %v696 = vsub.f32 %v647, %v680
      %v697 = vsub.f32 %v652, %v681
      %v698 = vsub.f32 %v657, %v682
      %v699 = vld [vmem:[%s4] sm:$0x1]
      %v701 = vlaneseq
      %v702 = vshrl.u32 %v701, 7
      %v703 = vsub.s32 0, %v702
      %v704 = vrot.slane %v699, %v703
      %v706 = vadd.f32 %v683, %v704
      %v707 = vadd.f32 %v684, %v704
      %v708 = vadd.f32 %v685, %v704
      %v709 = vadd.f32 %v686, %v704
      %v710 = vadd.f32 %v687, %v704
      %v711 = vadd.f32 %v688, %v704
      %v712 = vadd.f32 %v689, %v704
      %v713 = vadd.f32 %v690, %v704
      %v714 = vadd.f32 %v691, %v704
      %v715 = vadd.f32 %v692, %v704
      %v716 = vadd.f32 %v693, %v704
      %v717 = vadd.f32 %v694, %v704
      %v718 = vadd.f32 %v695, %v704
      %v719 = vadd.f32 %v696, %v704
      %v720 = vadd.f32 %v697, %v704
      %v721 = vadd.f32 %v698, %v704
      %vm722 = vcmp.gt.f32.partialorder %v228, 0.0
      %vm723 = vcmp.gt.f32.partialorder %v229, 0.0
      %vm724 = vcmp.gt.f32.partialorder %v230, 0.0
      %vm725 = vcmp.gt.f32.partialorder %v231, 0.0
      %vm726 = vcmp.gt.f32.partialorder %v232, 0.0
      %vm727 = vcmp.gt.f32.partialorder %v233, 0.0
      %vm728 = vcmp.gt.f32.partialorder %v234, 0.0
      %vm729 = vcmp.gt.f32.partialorder %v235, 0.0
      %vm730 = vcmp.gt.f32.partialorder %v236, 0.0
      %vm731 = vcmp.gt.f32.partialorder %v237, 0.0
      %vm732 = vcmp.gt.f32.partialorder %v238, 0.0
      %vm733 = vcmp.gt.f32.partialorder %v239, 0.0
      %vm734 = vcmp.gt.f32.partialorder %v240, 0.0
      %vm735 = vcmp.gt.f32.partialorder %v241, 0.0
      %vm736 = vcmp.gt.f32.partialorder %v242, 0.0
      %vm737 = vcmp.gt.f32.partialorder %v243, 0.0
      %v738 = vsel %vm722, %v706, 0.0
      %v739 = vsel %vm723, %v707, 0.0
      %v740 = vsel %vm724, %v708, 0.0
      %v741 = vsel %vm725, %v709, 0.0
      %v742 = vsel %vm726, %v710, 0.0
      %v743 = vsel %vm727, %v711, 0.0
      %v744 = vsel %vm728, %v712, 0.0
      %v745 = vsel %vm729, %v713, 0.0
      %v746 = vsel %vm730, %v714, 0.0
      %v747 = vsel %vm731, %v715, 0.0
      %v748 = vsel %vm732, %v716, 0.0
      %v749 = vsel %vm733, %v717, 0.0
      %v750 = vsel %vm734, %v718, 0.0
      %v751 = vsel %vm735, %v719, 0.0
      %v752 = vsel %vm736, %v720, 0.0
      %v753 = vsel %vm737, %v721, 0.0
      %754 = vst.msk [vmem:[%s226] sm:$0xff] %vm247, %v738
      %755 = vst.msk [vmem:[%s226 + $0x8] sm:$0xff] %vm247, %v739
      %756 = vst.msk [vmem:[%s226 + $0x10] sm:$0xff] %vm247, %v740
      %757 = vst.msk [vmem:[%s226 + $0x18] sm:$0xff] %vm247, %v741
      %758 = vst.msk [vmem:[%s226 + $0x20] sm:$0xff] %vm247, %v742
      %759 = vst.msk [vmem:[%s226 + $0x28] sm:$0xff] %vm247, %v743
      %760 = vst.msk [vmem:[%s226 + $0x30] sm:$0xff] %vm247, %v744
      %761 = vst.msk [vmem:[%s226 + $0x38] sm:$0xff] %vm247, %v745
      %762 = vst.msk [vmem:[%s226 + $0x40] sm:$0xff] %vm247, %v746
      %763 = vst.msk [vmem:[%s226 + $0x48] sm:$0xff] %vm247, %v747
      %764 = vst.msk [vmem:[%s226 + $0x50] sm:$0xff] %vm247, %v748
      %765 = vst.msk [vmem:[%s226 + $0x58] sm:$0xff] %vm247, %v749
      %766 = vst.msk [vmem:[%s226 + $0x60] sm:$0xff] %vm247, %v750
      %767 = vst.msk [vmem:[%s226 + $0x68] sm:$0xff] %vm247, %v751
      %768 = vst.msk [vmem:[%s226 + $0x70] sm:$0xff] %vm247, %v752
      %769 = vst.msk [vmem:[%s226 + $0x78] sm:$0xff] %vm247, %v753
      %s770 = smul.u32 16, %s16
      %p771 = scmp.lt.s32.totalorder %s770, 31
      %s772 = scalar_select %p771, %s770, 31
      %s773 = smul.addr %s772, 8
      %s774 = scalar_lea.vmem %s5, %s773
      // Predicated region
      $region41: #{ode_func_forward.1} parent=39 // pred_check
        %p775 = pneg %p144
      $region42: #{ode_func_forward.1} parent=39 // pred_check_branch
        %777 = sbr.rel (%p775) target = $region44
      $region43: #{ode_func_forward.1} parent=39 // pred_region
        %s778 = smul.u32 16, %s16
      $region44: #{ode_func_forward.1} parent=39 // pred_fallthru
        _
    $region40: #{ode_func_forward.1} parent=5 // pred_fallthru
      _
    %p779 = scmp.le.s32.totalorder 2, %s11
    // Predicated region
    $region45: #{ode_func_forward.1} parent=5 // pred_check
      %p780 = pneg %p779
    $region46: #{ode_func_forward.1} parent=5 // pred_check_branch
      %782 = sbr.rel (%p780) target = $region48
    $region47: #{ode_func_forward.1} parent=5 // pred_region
      %s783 = ssub.s32 %s11, 2
      // Predicated region
      $region49: #{ode_func_forward.1} parent=47 // pred_check
        %p784 = pneg %p150
      $region50: #{ode_func_forward.1} parent=47 // pred_check_branch
        %786 = sbr.rel (%p784) target = $region52
      $region51: #{ode_func_forward.1} parent=47 // pred_region
        %s787 = smul.u32 16, %s17
        %p788 = scmp.lt.s32.totalorder %s787, 31
        %s789 = scalar_select %p788, %s787, 31
        %s790 = smul.addr %s789, 8
        %s791 = scalar_lea.vmem %s5, %s790
      $region52: #{ode_func_forward.1} parent=47 // pred_fallthru
        _
    $region48: #{ode_func_forward.1} parent=5 // pred_fallthru
      _
  $region6: #{ode_func_forward.1} parent=0 // loop_footer
    %s15 = sadd.s32 1, %s11
  $region7: #{ode_func_forward.1} parent=0 // loop_footer_branch
    %10 = sbr.rel target = $region3
  $region8: #{ode_func_forward.1} parent=0 // loop_exit
    _

</llo_original>
